<compile_context>
chip_gen: v6e
topology: v6e:2x2x1
jax: 0.10.0
libtpu: 0.0.40
codegen_flags: <defaults>
</compile_context>

<pallas_src>
import math

import jax
import jax.numpy as jnp
from jax.experimental import pallas as pl
from jax.experimental.pallas import tpu as pltpu


# -----------------------------------------------------------------------------
# Irreps configuration (same role as irreps_in[field] in the PyTorch module).
# "32x0e + 16x1o + 8x2e"  ->  feature_dim = 32*1 + 16*3 + 8*5 = 120
# irreps_out defaults to irreps_in (out_field == field).
# -----------------------------------------------------------------------------
IRREPS = ((32, 0), (16, 1), (8, 2))          # (multiplicity, l)
FEATURE_DIM = sum(mul * (2 * l + 1) for mul, l in IRREPS)

LANE = 128      # lane width: pad feature dims to a multiple of this
SUBLANE = 8     # sublane width: atom-tile rows must be a multiple of this


def _round_up(n: int, m: int) -> int:
    return ((n + m - 1) // m) * m


def init_dense_weight(key):
    """Per-irrep weights ~ N(0,1) (e3nn init), expanded to a dense block-diagonal
    [Din, Dout] matrix with m-component sharing and 1/sqrt(fan_in) path norm."""
    blocks = []
    keys = jax.random.split(key, len(IRREPS))
    for (mul, l), k in zip(IRREPS, keys):
        dim = 2 * l + 1
        w = jax.random.normal(k, (mul, mul), dtype=jnp.float32)      # mul_in x mul_out
        w = w / math.sqrt(mul)                                       # path normalization
        blocks.append(jnp.kron(w, jnp.eye(dim, dtype=jnp.float32)))  # share across m
    din = dout = FEATURE_DIM
    W = jnp.zeros((din, dout), dtype=jnp.float32)
    off = 0
    for b in blocks:
        n = b.shape[0]
        W = W.at[off:off + n, off:off + n].set(b)
        off += n
    return W


# -----------------------------------------------------------------------------
# Pallas kernel: per-atom linear map  y = x @ W   (f32 MXU accumulation)
# Output is stored in f32 (accumulation dtype); any downcast happens in the
# wrapper, outside the kernel's store path.
# -----------------------------------------------------------------------------
def atomwise_linear_kernel(x_ref, w_ref, o_ref):
    o_ref[...] = jnp.dot(
        x_ref[...], w_ref[...], preferred_element_type=jnp.float32
    )


def atomwise_linear(x, W, *, tile_atoms=512, compute_dtype=None):
    """Apply the per-atom equivariant linear.

    x: [num_atoms, Din] node features
    W: [Din, Dout] dense (block-diagonal-expanded) equivariant weight
    tile_atoms: atom rows per grid step (rounded to a multiple of 8, clamped
                to the padded atom count)
    compute_dtype: optional streaming dtype for x/W (e.g. jnp.bfloat16);
                   accumulation is always f32.
    """
    n_atoms, din = x.shape
    din_w, dout = W.shape
    assert din_w == din, "weight/input feature mismatch"

    # Lane-dense feature padding (zero columns/rows of W are mathematically exact).
    din_p = _round_up(din, LANE)
    dout_p = _round_up(dout, LANE)

    # Atom tiling: multiple of 8 sublanes, no larger than the padded atom count,
    # ceiling-divide grid with a zero-padded tail tile.
    tile_atoms = _round_up(max(1, min(tile_atoms, _round_up(n_atoms, SUBLANE))), SUBLANE)
    n_pad = _round_up(n_atoms, tile_atoms)
    grid = (n_pad // tile_atoms,)

    cdt = compute_dtype if compute_dtype is not None else x.dtype
    x_p = jnp.zeros((n_pad, din_p), cdt).at[:n_atoms, :din].set(x.astype(cdt))
    W_p = jnp.zeros((din_p, dout_p), cdt).at[:din, :dout].set(W.astype(cdt))

    y_p = pl.pallas_call(
        atomwise_linear_kernel,
        out_shape=jax.ShapeDtypeStruct((n_pad, dout_p), jnp.float32),
        grid_spec=pltpu.PrefetchScalarGridSpec(
            num_scalar_prefetch=0,
            grid=grid,
            in_specs=[
                # Atom tile: streams over the grid.
                pl.BlockSpec((tile_atoms, din_p), lambda i: (i, 0)),
                # Full weight, constant index -> single-buffered, loaded once.
                pl.BlockSpec((din_p, dout_p), lambda i: (0, 0),
                             pipeline_mode=pl.Buffered(1)),
            ],
            out_specs=pl.BlockSpec((tile_atoms, dout_p), lambda i: (i, 0)),
        ),
        compiler_params=pltpu.CompilerParams(
            dimension_semantics=("parallel",),   # shards grid across TCs on v7x
        ),
    )(x_p, W_p)

    y = y_p[:n_atoms, :dout]
    if x.dtype != jnp.float32:
        # Downcast in the wrapper (keeps the kernel store path cast-free on v5e).
        y = y.astype(x.dtype)
    return y


if __name__ == "__main__":
    key = jax.random.PRNGKey(0)
    k_w, k_x = jax.random.split(key)

    # Small, deliberately non-tile-aligned atom count to exercise the padded tail.
    num_atoms = 200
    W = init_dense_weight(k_w)                                          # [120, 120]
    x = jax.random.normal(k_x, (num_atoms, FEATURE_DIM), jnp.float32)   # node features

    # f32 path — exact vs. dense reference (tile_atoms=64 -> grid of 4 steps).
    y = atomwise_linear(x, W, tile_atoms=64)
    y = jax.block_until_ready(y)

    y_ref = x @ W
    assert y.shape == (num_atoms, FEATURE_DIM)
    assert jnp.allclose(y, y_ref, atol=1e-5, rtol=1e-5), "f32 mismatch vs reference"

    # bf16 streaming path (f32 accumulation) — looser tolerance.
    y_bf16 = atomwise_linear(x, W, tile_atoms=64, compute_dtype=jnp.bfloat16)
    y_bf16 = jax.block_until_ready(y_bf16)
    assert y_bf16.shape == (num_atoms, FEATURE_DIM)
    assert float(jnp.max(jnp.abs(y_bf16 - y_ref))) < 1e-1, "bf16 path too far from reference"

    print("KERNEL_OK")
</pallas_src>

<mosaic_0001>
module attributes {stable_mosaic.version = 11 : i64} {
  func.func @atomwise_linear_kernel(%arg0: i32, %arg1: memref<64x128xf32, #tpu.memory_space<vmem>>, %arg2: memref<128x128xf32, #tpu.memory_space<vmem>>, %arg3: memref<64x128xf32, #tpu.memory_space<vmem>>) attributes {dimension_semantics = [#tpu.dimension_semantics<parallel>], iteration_bounds = array<i64: 4>, scalar_prefetch = 0 : i64, scratch_operands = 0 : i64, tpu.core_type = #tpu.core_type<tc>, window_params = [{transform_indices = @transform_0, window_bounds = array<i64: 64, 128>}, {pipeline_mode = #tpu.pipeline_mode<synchronous>, transform_indices = @transform_1, window_bounds = array<i64: 128, 128>}, {transform_indices = @transform_2, window_bounds = array<i64: 64, 128>}]} {
    %c0 = arith.constant 0 : index
    %c0_0 = arith.constant 0 : index
    %0 = vector.load %arg1[%c0, %c0_0] : memref<64x128xf32, #tpu.memory_space<vmem>>, vector<64x128xf32>
    %c0_1 = arith.constant 0 : index
    %c0_2 = arith.constant 0 : index
    %1 = vector.load %arg2[%c0_1, %c0_2] : memref<128x128xf32, #tpu.memory_space<vmem>>, vector<128x128xf32>
    %cst = arith.constant dense<0.000000e+00> : vector<64x128xf32>
    %2 = tpu.matmul %0, %1, %cst {dimension_numbers = #tpu.dot_dimension_numbers<[1], [0], [0], [1], [0, 0, 1, 1], [], []>} : vector<64x128xf32>, vector<128x128xf32>, vector<64x128xf32> -> vector<64x128xf32>
    %c0_3 = arith.constant 0 : index
    %c0_4 = arith.constant 0 : index
    %3 = vector.load %arg3[%c0_3, %c0_4] : memref<64x128xf32, #tpu.memory_space<vmem>>, vector<64x128xf32>
    tpu.vector_store %arg3[%c0_3, %c0_4], %2 {strides = array<i32>} : memref<64x128xf32, #tpu.memory_space<vmem>>, vector<64x128xf32>,
    return
  }
  func.func @transform_0(%arg0: i32) -> (i32, i32) {
    %c0_i32 = arith.constant 0 : i32
    %c0_i32_0 = arith.constant 0 : i32
    return %arg0, %c0_i32 : i32, i32
  }
  func.func @transform_1(%arg0: i32) -> (i32, i32) {
    %c0_i32 = arith.constant 0 : i32
    %c0_i32_0 = arith.constant 0 : i32
    %c0_i32_1 = arith.constant 0 : i32
    return %c0_i32, %c0_i32_0 : i32, i32
  }
  func.func @transform_2(%arg0: i32) -> (i32, i32) {
    %c0_i32 = arith.constant 0 : i32
    %c0_i32_0 = arith.constant 0 : i32
    return %arg0, %c0_i32 : i32, i32
  }
}

</mosaic_0001>

<llo_original>
// kernel: tpu_custom_call.1
$region0: #{tpu_custom_call.1}
  #allocation0 [shape = 'u32[]', space=smem, size = 0x4, offset = 0x4, fixed_abs, tag = 'smem constant byte address 0x4 - core index']
  #allocation1 [shape = 'u32[144,128]{1,0:T(1,128)}', space=vmem, size = 0x12000, scoped, tag = 'internal scratch']
  %s0 = inlined_call_operand.hbm [shape: f32[256,128], index: 0, kind: input, shape index: {}]
  %s1 = inlined_call_operand.hbm [shape: f32[128,128], index: 1, kind: input, shape index: {}]
  %s2 = inlined_call_operand.hbm [shape: f32[256,128], index: 2, kind: output, shape index: {}]
  %s3 = sld [smem:[#allocation0]]
  $region49: #{tpu_custom_call.1} parent=0
    _
  %s5 = ssub.s32 1, %s3
  %s6 = scalar_select 0, %s5, %s3
  $region1: #{tpu_custom_call.1} parent=0
    #allocation2 [shape = 'u8[65536]{0}', space=vmem, size = 0x10000, scoped, tag = 'input window, operand 0']
    #allocation3 [shape = 's32[2]{0}', space=sflag, size = 0x8, scoped, tag = 'scoped memory for tpu_custom_call.1']
    #allocation4 [shape = 's32[2]{0}', space=sflag, size = 0x8, scoped, tag = 'scoped memory for tpu_custom_call.1']
    #allocation5 [shape = 'u8[65536]{0}', space=vmem, size = 0x10000, scoped, tag = 'input window, operand 1, single buffered']
    #allocation6 [shape = 's32[1]{0}', space=sflag, size = 0x4, scoped, tag = 'scoped memory for tpu_custom_call.1']
    #allocation7 [shape = 'u8[65536]{0}', space=vmem, size = 0x10000, scoped, tag = 'output window, operand 0']
    %7 = vsyncpa [#allocation3], 0
    %s8 = scalar_lea.sflag [#allocation3], 1
    %9 = vsyncpa %s8, 0
    %10 = vsyncpa [#allocation6], 0
    %11 = vsyncpa [#allocation4], 0
    %s12 = scalar_lea.sflag [#allocation4], 1
    %13 = vsyncpa %s12, 0
    loop: start=0, step=1, limit=6
    $region2: #{tpu_custom_call.1} parent=1 // loop_pre_header
      _
    $region3: #{tpu_custom_call.1} parent=1 // loop_header
      %s15 = sphi 0, %s19
      %p16 = scmp.ge.s32.totalorder %s15, 6
      %s25 = sphi 0, %s27
      %s28 = sphi 0, %s25
      %s29 = sphi 0, %s28
      %s45 = sphi 0, %s29
      %s49 = sphi 0, %s49
      %s51 = sphi 0, %s49
      %s52 = sphi 0, %s51
      %s66 = sphi 0, %s52
      %s72 = sphi 0, %s74
      %s75 = sphi 0, %s72
      %s76 = sphi 0, %s75
      %s92 = sphi 0, %s76
    $region4: #{tpu_custom_call.1} parent=1 // loop_header_branch
      %18 = sbr.rel (%p16) target = $region8
    $region5: #{tpu_custom_call.1} parent=1 // loop_body
      %s20 = ssub.s32 %s15, 1
      %s21 = ssub.s32 %s15, 2
      %s22 = sadd.s32 %s15, 1
      %s23 = ssub.s32 %s15, %s22
      %p24 = scmp.eq.s32.totalorder %s23, 0
      %s26 = sadd.s32 %s25, 1
      %s27 = scalar_select %p24, %s25, %s26
      %p30 = pneg %p24
      %p31 = scmp.eq.s32.totalorder %s15, 3
      %p32 = por %p30, %p31
      %p33 = scmp.ne.s32.totalorder %s25, %s28
      %p34 = scmp.eq.s32.totalorder %s15, 0
      %p35 = por %p33, %p34
      %p36 = scmp.ne.s32.totalorder %s25, %s28
      %p37 = scmp.eq.s32.totalorder %s20, 3
      %p38 = por %p36, %p37
      %p39 = scmp.ne.s32.totalorder %s28, %s29
      %p40 = scmp.eq.s32.totalorder %s20, 0
      %p41 = por %p39, %p40
      %p42 = scmp.ne.s32.totalorder %s28, %s29
      %p43 = scmp.eq.s32.totalorder %s21, 3
      %p44 = por %p42, %p43
      %p46 = scmp.ne.s32.totalorder %s29, %s45
      %p47 = scmp.eq.s32.totalorder %s21, 0
      %p48 = por %p46, %p47
      %s50 = sadd.s32 %s49, 1
      %p53 = scmp.eq.s32.totalorder %s15, 3
      %p54 = scmp.ne.s32.totalorder %s49, %s51
      %p55 = scmp.eq.s32.totalorder %s15, 0
      %p56 = por %p54, %p55
      %p57 = scmp.ne.s32.totalorder %s49, %s51
      %p58 = scmp.eq.s32.totalorder %s20, 3
      %p59 = por %p57, %p58
      %p60 = scmp.ne.s32.totalorder %s51, %s52
      %p61 = scmp.eq.s32.totalorder %s20, 0
      %p62 = por %p60, %p61
      %p63 = scmp.ne.s32.totalorder %s51, %s52
      %p64 = scmp.eq.s32.totalorder %s21, 3
      %p65 = por %p63, %p64
      %p67 = scmp.ne.s32.totalorder %s52, %s66
      %p68 = scmp.eq.s32.totalorder %s21, 0
      %p69 = por %p67, %p68
      %s70 = ssub.s32 %s15, %s22
      %p71 = scmp.eq.s32.totalorder %s70, 0
      %s73 = sadd.s32 %s72, 1
      %s74 = scalar_select %p71, %s72, %s73
      %p77 = pneg %p71
      %p78 = scmp.eq.s32.totalorder %s15, 3
      %p79 = por %p77, %p78
      %p80 = scmp.ne.s32.totalorder %s72, %s75
      %p81 = scmp.eq.s32.totalorder %s15, 0
      %p82 = por %p80, %p81
      %p83 = scmp.ne.s32.totalorder %s72, %s75
      %p84 = scmp.eq.s32.totalorder %s20, 3
      %p85 = por %p83, %p84
      %p86 = scmp.ne.s32.totalorder %s75, %s76
      %p87 = scmp.eq.s32.totalorder %s20, 0
      %p88 = por %p86, %p87
      %p89 = scmp.ne.s32.totalorder %s75, %s76
      %p90 = scmp.eq.s32.totalorder %s21, 3
      %p91 = por %p89, %p90
      %p93 = scmp.ne.s32.totalorder %s76, %s92
      %p94 = scmp.eq.s32.totalorder %s21, 0
      %p95 = por %p93, %p94
      %p96 = scmp.le.s32.totalorder 1, %s15
      %p97 = scmp.lt.s32.totalorder %s15, 5
      %p98 = pnand %p96, %p97
      %p99 = pneg %p98
      // Predicated region
      $region9: #{tpu_custom_call.1} parent=5 // pred_check
        _
      $region10: #{tpu_custom_call.1} parent=5 // pred_check_branch
        %101 = sbr.rel (%p98) target = $region12
      $region11: #{tpu_custom_call.1} parent=5 // pred_region
        %s102 = ssub.s32 %s15, 1
        // Predicated region
        $region13: #{tpu_custom_call.1} parent=11 // pred_check
          %p103 = pneg %p62
        $region14: #{tpu_custom_call.1} parent=11 // pred_check_branch
          %105 = sbr.rel (%p103) target = $region16
        $region15: #{tpu_custom_call.1} parent=11 // pred_region
          %s107 = ssub.s32 2048, 2048
          %108 = vsyncadd [#allocation6], %s107
          %s109 = sshll.u32 [#allocation5], 4
          %s110 = int_to_ptr.vmem [resolvable:$true] %s109
          %115 = dma.hbm_to_vmem [thread:$0]  %s1, 2048, %s110, [#allocation6], 128, 128, 8
        $region16: #{tpu_custom_call.1} parent=11 // pred_fallthru
          _
      $region12: #{tpu_custom_call.1} parent=5 // pred_fallthru
        _
      %p116 = scmp.lt.s32.totalorder %s15, 4
      // Predicated region
      $region17: #{tpu_custom_call.1} parent=5 // pred_check
        %p117 = pneg %p116
      $region18: #{tpu_custom_call.1} parent=5 // pred_check_branch
        %119 = sbr.rel (%p117) target = $region20
      $region19: #{tpu_custom_call.1} parent=5 // pred_region
        // Predicated region
        $region21: #{tpu_custom_call.1} parent=19 // pred_check
          %p120 = pneg %p35
        $region22: #{tpu_custom_call.1} parent=19 // pred_check_branch
          %122 = sbr.rel (%p120) target = $region24
        $region23: #{tpu_custom_call.1} parent=19 // pred_region
          %s123 = sand.u32 %s25, 1
          %s124 = scalar_lea.sflag [#allocation3], %s123
          %s125 = sand.u32 %s25, 1
          %s126 = smul.addr %s125, 64
          %s127 = scalar_lea.vmem [#allocation2], %s126
          %s128 = smul.u32 8, %s15
          %s130 = ssub.s32 1024, 1024
          %131 = vsyncadd %s124, %s130
          %s132 = smul.addr %s128, 128
          %s133 = scalar_lea.hbm %s0, %s132
          %s134 = sshll.u32 %s127, 4
          %s135 = int_to_ptr.vmem [resolvable:$true] %s134
          %140 = dma.hbm_to_vmem [thread:$0]  %s133, 1024, %s135, %s124, 128, 128, 8
        $region24: #{tpu_custom_call.1} parent=19 // pred_fallthru
          _
      $region20: #{tpu_custom_call.1} parent=5 // pred_fallthru
        _
      %p141 = scmp.le.s32.totalorder 1, %s15
      %p142 = scmp.lt.s32.totalorder %s15, 5
      %p143 = pnand %p141, %p142
      %p144 = pneg %p143
      // Predicated region
      $region25: #{tpu_custom_call.1} parent=5 // pred_check
        _
      $region26: #{tpu_custom_call.1} parent=5 // pred_check_branch
        %146 = sbr.rel (%p143) target = $region28
      $region27: #{tpu_custom_call.1} parent=5 // pred_region
        %s147 = ssub.s32 %s15, 1
        %s148 = sand.u32 %s28, 1
        %s149 = scalar_lea.sflag [#allocation3], %s148
        %s150 = sand.u32 %s28, 1
        %s151 = smul.addr %s150, 64
        %s152 = scalar_lea.vmem [#allocation2], %s151
        // Predicated region
        $region29: #{tpu_custom_call.1} parent=27 // pred_check
          %p153 = pneg %p41
        $region30: #{tpu_custom_call.1} parent=27 // pred_check_branch
          %155 = sbr.rel (%p153) target = $region32
        $region31: #{tpu_custom_call.1} parent=27 // pred_region
          %156 = dma.done %s149, 1024
        $region32: #{tpu_custom_call.1} parent=27 // pred_fallthru
          _
        // Predicated region
        $region33: #{tpu_custom_call.1} parent=27 // pred_check
          %p157 = pneg %p62
        $region34: #{tpu_custom_call.1} parent=27 // pred_check_branch
          %159 = sbr.rel (%p157) target = $region36
        $region35: #{tpu_custom_call.1} parent=27 // pred_region
          %160 = dma.done [#allocation6], 2048
        $region36: #{tpu_custom_call.1} parent=27 // pred_fallthru
          _
        %s161 = sand.u32 %s28, 1
        %s162 = scalar_lea.sflag [#allocation3], %s161
        %s163 = sand.u32 %s28, 1
        %s164 = smul.addr %s163, 64
        %s165 = scalar_lea.vmem [#allocation2], %s164
        %p166 = pneg %p41
        %p167 = pneg %p38
        %p168 = pneg %p62
        %p169 = pneg %p59
        %p170 = pneg %p88
        %p171 = pneg %p85
        %s172 = sand.u32 %s75, 1
        %s173 = scalar_lea.sflag [#allocation4], %s172
        %s174 = sand.u32 %s75, 1
        %s175 = smul.addr %s174, 64
        %s176 = scalar_lea.vmem [#allocation7], %s175
        %s177 = smul.u32 8, %s20
        %s178 = smul.u32 8, %s20
        %v179 = vld [vmem:[%s152] sm:$0xff]
        %v180 = vld [vmem:[%s152 + $0x8] sm:$0xff]
        %v181 = vld [vmem:[%s152 + $0x10] sm:$0xff]
        %v182 = vld [vmem:[%s152 + $0x18] sm:$0xff]
        %v183 = vld [vmem:[%s152 + $0x20] sm:$0xff]
        %v184 = vld [vmem:[%s152 + $0x28] sm:$0xff]
        %v185 = vld [vmem:[%s152 + $0x30] sm:$0xff]
        %v186 = vld [vmem:[%s152 + $0x38] sm:$0xff]
        %v187 = vld [vmem:[#allocation5] sm:$0xff]
        %v188 = vld [vmem:[#allocation5 + $0x8] sm:$0xff]
        %v189 = vld [vmem:[#allocation5 + $0x10] sm:$0xff]
        %v190 = vld [vmem:[#allocation5 + $0x18] sm:$0xff]
        %v191 = vld [vmem:[#allocation5 + $0x20] sm:$0xff]
        %v192 = vld [vmem:[#allocation5 + $0x28] sm:$0xff]
        %v193 = vld [vmem:[#allocation5 + $0x30] sm:$0xff]
        %v194 = vld [vmem:[#allocation5 + $0x38] sm:$0xff]
        %v195 = vld [vmem:[#allocation5 + $0x40] sm:$0xff]
        %v196 = vld [vmem:[#allocation5 + $0x48] sm:$0xff]
        %v197 = vld [vmem:[#allocation5 + $0x50] sm:$0xff]
        %v198 = vld [vmem:[#allocation5 + $0x58] sm:$0xff]
        %v199 = vld [vmem:[#allocation5 + $0x60] sm:$0xff]
        %v200 = vld [vmem:[#allocation5 + $0x68] sm:$0xff]
        %v201 = vld [vmem:[#allocation5 + $0x70] sm:$0xff]
        %v202 = vld [vmem:[#allocation5 + $0x78] sm:$0xff]
        %203 = vmatprep.subr.mxu0 0.0
        %204 = vmatpush1.msra.mxu0 %v202
        %205 = vmatprep.subr.mxu0 0.0
        %206 = vmatpush1.msra.mxu0 %v201
        %207 = vmatprep.subr.mxu0 0.0
        %208 = vmatpush1.msra.mxu0 %v200
        %209 = vmatprep.subr.mxu0 0.0
        %210 = vmatpush1.msra.mxu0 %v199
        %211 = vmatprep.subr.mxu0 0.0
        %212 = vmatpush1.msra.mxu0 %v198
        %213 = vmatprep.subr.mxu0 0.0
        %214 = vmatpush1.msra.mxu0 %v197
        %215 = vmatprep.subr.mxu0 0.0
        %216 = vmatpush1.msra.mxu0 %v196
        %217 = vmatprep.subr.mxu0 0.0
        %218 = vmatpush1.msra.mxu0 %v195
        %219 = vmatprep.subr.mxu0 0.0
        %220 = vmatpush1.msra.mxu0 %v194
        %221 = vmatprep.subr.mxu0 0.0
        %222 = vmatpush1.msra.mxu0 %v193
        %223 = vmatprep.subr.mxu0 0.0
        %224 = vmatpush1.msra.mxu0 %v192
        %225 = vmatprep.subr.mxu0 0.0
        %226 = vmatpush1.msra.mxu0 %v191
        %227 = vmatprep.subr.mxu0 0.0
        %228 = vmatpush1.msra.mxu0 %v190
        %229 = vmatprep.subr.mxu0 0.0
        %230 = vmatpush1.msra.mxu0 %v189
        %231 = vmatprep.subr.mxu0 0.0
        %232 = vmatpush1.msra.mxu0 %v188
        %233 = vmatprep.subr.mxu0 0.0
        %234 = vmatpush1.msra.mxu0 %v187
        %235 = vmatprep.subr.mxu0 0.0
        %236 = vmatpush2.msra.mxu0 0.0
        %237 = vmatprep.subr.mxu0 0.0
        %238 = vmatpush2.msra.mxu0 0.0
        %239 = vmatprep.subr.mxu0 0.0
        %240 = vmatpush2.msra.mxu0 0.0
        %241 = vmatprep.subr.mxu0 0.0
        %242 = vmatpush2.msra.mxu0 0.0
        %243 = vmatprep.subr.mxu0 0.0
        %244 = vmatpush2.msra.mxu0 0.0
        %245 = vmatprep.subr.mxu0 0.0
        %246 = vmatpush2.msra.mxu0 0.0
        %247 = vmatprep.subr.mxu0 0.0
        %248 = vmatpush2.msra.mxu0 0.0
        %249 = vmatprep.subr.mxu0 0.0
        %250 = vmatpush2.msra.mxu0 0.0
        %251 = vmatprep.subr.mxu0 0.0
        %252 = vmatpush2.msra.mxu0 0.0
        %253 = vmatprep.subr.mxu0 0.0
        %254 = vmatpush2.msra.mxu0 0.0
        %255 = vmatprep.subr.mxu0 0.0
        %256 = vmatpush2.msra.mxu0 0.0
        %257 = vmatprep.subr.mxu0 0.0
        %258 = vmatpush2.msra.mxu0 0.0
        %259 = vmatprep.subr.mxu0 0.0
        %260 = vmatpush2.msra.mxu0 0.0
        %261 = vmatprep.subr.mxu0 0.0
        %262 = vmatpush2.msra.mxu0 0.0
        %263 = vmatprep.subr.mxu0 0.0
        %264 = vmatpush2.msra.mxu0 0.0
        %265 = vmatprep.subr.mxu0 0.0
        %266 = vmatpush2.msra.mxu0 0.0
        %267 = vmatprep.mubr.f32.mxu0 0.0
        %268 = vmatmul.mubr.f32.gmra.mxu0 %v179
        %v269 = vpop.f32.mrf.mxu0
        %v270 = vadd.f32 0.0, %v269
        %v271 = vpop.f32.mrf.mxu0
        %272 = vmatprep.mubr.f32.mxu0 0.0
        %273 = vmatmul.mubr.f32.gmra.mxu0 %v180
        %v274 = vpop.f32.mrf.mxu0
        %v275 = vadd.f32 0.0, %v274
        %v276 = vpop.f32.mrf.mxu0
        %277 = vmatprep.mubr.f32.mxu0 0.0
        %278 = vmatmul.mubr.f32.gmra.mxu0 %v181
        %v279 = vpop.f32.mrf.mxu0
        %v280 = vadd.f32 0.0, %v279
        %v281 = vpop.f32.mrf.mxu0
        %282 = vmatprep.mubr.f32.mxu0 0.0
        %283 = vmatmul.mubr.f32.gmra.mxu0 %v182
        %v284 = vpop.f32.mrf.mxu0
        %v285 = vadd.f32 0.0, %v284
        %v286 = vpop.f32.mrf.mxu0
        %287 = vmatprep.mubr.f32.mxu0 0.0
        %288 = vmatmul.mubr.f32.gmra.mxu0 %v183
        %v289 = vpop.f32.mrf.mxu0
        %v290 = vadd.f32 0.0, %v289
        %v291 = vpop.f32.mrf.mxu0
        %292 = vmatprep.mubr.f32.mxu0 0.0
        %293 = vmatmul.mubr.f32.gmra.mxu0 %v184
        %v294 = vpop.f32.mrf.mxu0
        %v295 = vadd.f32 0.0, %v294
        %v296 = vpop.f32.mrf.mxu0
        %297 = vmatprep.mubr.f32.mxu0 0.0
        %298 = vmatmul.mubr.f32.gmra.mxu0 %v185
        %v299 = vpop.f32.mrf.mxu0
        %v300 = vadd.f32 0.0, %v299
        %v301 = vpop.f32.mrf.mxu0
        %302 = vmatprep.mubr.f32.mxu0 0.0
        %303 = vmatmul.mubr.f32.gmra.mxu0 %v186
        %v304 = vpop.f32.mrf.mxu0
        %v305 = vadd.f32 0.0, %v304
        %v306 = vpop.f32.mrf.mxu0
        %307 = vdwg.mxu0
        %308 = vst [vmem:[%s176] sm:$0xff] %v270
        %309 = vst [vmem:[%s176 + $0x8] sm:$0xff] %v275
        %310 = vst [vmem:[%s176 + $0x10] sm:$0xff] %v280
        %311 = vst [vmem:[%s176 + $0x18] sm:$0xff] %v285
        %312 = vst [vmem:[%s176 + $0x20] sm:$0xff] %v290
        %313 = vst [vmem:[%s176 + $0x28] sm:$0xff] %v295
        %314 = vst [vmem:[%s176 + $0x30] sm:$0xff] %v300
        %315 = vst [vmem:[%s176 + $0x38] sm:$0xff] %v305
        %s316 = sand.u32 %s75, 1
        %s317 = scalar_lea.sflag [#allocation4], %s316
        %s318 = sand.u32 %s75, 1
        %s319 = smul.addr %s318, 64
        %s320 = scalar_lea.vmem [#allocation7], %s319
        // Predicated region
        $region37: #{tpu_custom_call.1} parent=27 // pred_check
          %p321 = pneg %p85
        $region38: #{tpu_custom_call.1} parent=27 // pred_check_branch
          %323 = sbr.rel (%p321) target = $region40
        $region39: #{tpu_custom_call.1} parent=27 // pred_region
          %s324 = smul.u32 8, %s20
          %s326 = ssub.s32 1024, 1024
          %327 = vsyncadd %s317, %s326
          %s328 = smul.addr %s324, 128
          %s329 = scalar_lea.hbm %s2, %s328
          %s330 = sshll.u32 %s320, 4
          %s331 = int_to_ptr.vmem [resolvable:$true] %s330
          %336 = dma.vmem_to_hbm [thread:$0]  %s331, 1024, %s329, %s317, 128, 128, 8
        $region40: #{tpu_custom_call.1} parent=27 // pred_fallthru
          _
      $region28: #{tpu_custom_call.1} parent=5 // pred_fallthru
        _
      %p337 = scmp.le.s32.totalorder 2, %s15
      // Predicated region
      $region41: #{tpu_custom_call.1} parent=5 // pred_check
        %p338 = pneg %p337
      $region42: #{tpu_custom_call.1} parent=5 // pred_check_branch
        %340 = sbr.rel (%p338) target = $region44
      $region43: #{tpu_custom_call.1} parent=5 // pred_region
        %s341 = ssub.s32 %s15, 2
        // Predicated region
        $region45: #{tpu_custom_call.1} parent=43 // pred_check
          %p342 = pneg %p91
        $region46: #{tpu_custom_call.1} parent=43 // pred_check_branch
          %344 = sbr.rel (%p342) target = $region48
        $region47: #{tpu_custom_call.1} parent=43 // pred_region
          %s345 = sand.u32 %s76, 1
          %s346 = scalar_lea.sflag [#allocation4], %s345
          %s347 = sand.u32 %s76, 1
          %s348 = smul.addr %s347, 64
          %s349 = scalar_lea.vmem [#allocation7], %s348
          %350 = dma.done %s346, 1024
        $region48: #{tpu_custom_call.1} parent=43 // pred_fallthru
          _
      $region44: #{tpu_custom_call.1} parent=5 // pred_fallthru
        _
    $region6: #{tpu_custom_call.1} parent=1 // loop_footer
      %s19 = sadd.s32 1, %s15
    $region7: #{tpu_custom_call.1} parent=1 // loop_footer_branch
      %14 = sbr.rel target = $region3
    $region8: #{tpu_custom_call.1} parent=1 // loop_exit
      _
    %351 = vsyncpa [#allocation3], 1
    %s352 = scalar_lea.sflag [#allocation3], 1
    %353 = vsyncpa %s352, 1
    %354 = vsyncpa [#allocation6], 1
    %355 = vsyncpa [#allocation4], 1
    %s356 = scalar_lea.sflag [#allocation4], 1
    %357 = vsyncpa %s356, 1

</llo_original>
